<compile_context>
chip_gen: v7x
topology: tpu7x:2x2x1
jax: 0.10.0
libtpu: 0.0.40
codegen_flags: <defaults>
</compile_context>

<pallas_src>
import math

import jax
import jax.numpy as jnp
from jax.experimental import pallas as pl
from jax.experimental.pallas import tpu as pltpu


_LANE_CAP = 4096            # lane-tile cap (multiple of 128)
_TILE_BYTES_CAP = 8 << 20   # <= 8 MiB / buffer -> ~32 MiB with 4 buffers (v7x-safe)


def _copy_kernel(x_ref, o_ref):
    # Pure lane-dense tile copy: the flatten already happened (for free) in
    # the wrapper's jnp.reshape.
    o_ref[...] = x_ref[...]


def _round_up(v: int, m: int) -> int:
    return ((v + m - 1) // m) * m


def _round_down(v: int, m: int) -> int:
    return (v // m) * m


def _sublane_min(itemsize: int) -> int:
    # f32 -> 8, bf16 -> 16, int8/fp8 -> 32 (packed sublane minimum).
    return max(8, 32 // max(1, itemsize))


def _pick_lane_width(total: int):
    """Largest multiple-of-128 divisor of `total` that is <= _LANE_CAP."""
    if total % 128 != 0:
        return None
    for k in range(min(_LANE_CAP, total) // 128, 0, -1):
        c = 128 * k
        if total % c == 0:
            return c
    return None


def _pallas_copy_2d(src: jax.Array) -> jax.Array:
    """Pipelined, aliased HBM->HBM copy of a 2-D array."""
    rows, cols = src.shape
    itemsize = src.dtype.itemsize
    sub = _sublane_min(itemsize)

    # Lane tile: full dim when it fits the cap, else a multiple of 128
    # (prefer one that divides cols to avoid masked partial stores).
    if cols <= _LANE_CAP:
        tc = cols
    else:
        tc = _LANE_CAP
        for k in range(_LANE_CAP // 128, 0, -1):
            if cols % (128 * k) == 0:
                tc = 128 * k
                break

    # Row tile: multiple of the packed sublane minimum, <= ~8 MiB per buffer,
    # and >= 2 grid steps along the parallel axis where possible (v7x dual-TC).
    if rows <= sub:
        tr = rows  # full-dim exemption
    else:
        tr = min(rows, 1024, max(1, _TILE_BYTES_CAP // max(1, tc * itemsize)))
        tr = max(sub, _round_down(tr, sub))
        if pl.cdiv(rows, tr) < 2:
            tr = max(sub, _round_up(pl.cdiv(rows, 2), sub))

    grid = (pl.cdiv(rows, tr), pl.cdiv(cols, tc))
    tile_bytes = tr * tc * itemsize
    vmem_limit = min(64 << 20, max(32 << 20, 4 * tile_bytes + (8 << 20)))

    return pl.pallas_call(
        _copy_kernel,
        out_shape=jax.ShapeDtypeStruct((rows, cols), src.dtype),
        grid=grid,
        in_specs=[pl.BlockSpec((tr, tc), lambda i, j: (i, j))],
        out_specs=pl.BlockSpec((tr, tc), lambda i, j: (i, j)),
        input_output_aliases={0: 0},
        compiler_params=pltpu.CompilerParams(
            dimension_semantics=("parallel", "parallel"),
            vmem_limit_bytes=vmem_limit,
        ),
        cost_estimate=pl.CostEstimate(
            flops=0,
            transcendentals=0,
            bytes_accessed=2 * rows * cols * itemsize,
        ),
    )(src)


def flatten_pallas(x: jax.Array, *, force_pallas: bool = False) -> jax.Array:
    """Equivalent of `Flatten().forward(x)` = x.view(N, -1)."""
    n = x.shape[0]
    flat = math.prod(x.shape[1:]) if x.ndim > 1 else 1

    # Zero-copy, lane-dense 2-D view: for a contiguous array this metadata
    # reshape IS the whole op. This is the default (and recommended) path.
    x2d = jnp.reshape(x, (n, flat))
    if not force_pallas:
        return x2d

    # Explicit materialized copy (kernel path), retiled on a bandwidth-
    # friendly view decoupled from the batch dim.
    total = n * flat
    lane = _pick_lane_width(total)
    if lane is not None:
        rows = total // lane
        y = _pallas_copy_2d(jnp.reshape(x2d, (rows, lane)))
        return jnp.reshape(y, (n, flat))
    # total not a multiple of 128: tile the (n, flat) view directly
    # (full-dim blocks / masked partial blocks; correctness unaffected).
    return _pallas_copy_2d(x2d)


if __name__ == "__main__":
    key = jax.random.PRNGKey(0)
    # Small NCHW input consistent with a conv-style feature map.
    x = jax.random.normal(key, (2, 4, 16, 16), dtype=jnp.float32)
    y_ref = x.reshape(x.shape[0], -1)  # == torch .view((N, -1)) on contiguous input

    # Default (recommended) path: free metadata reshape, no kernel.
    y_fast = flatten_pallas(x)
    jax.block_until_ready(y_fast)
    assert y_fast.shape == (2, 4 * 16 * 16)
    assert jnp.array_equal(y_fast, y_ref)

    # Forced Pallas copy path, so the kernel itself is exercised at this size.
    y = flatten_pallas(x, force_pallas=True)
    jax.block_until_ready(y)
    assert y.shape == (2, 4 * 16 * 16)
    assert y.dtype == x.dtype
    assert jnp.array_equal(y, y_ref)

    # Exercise the multi-tile (>=2 grid steps) path on a slightly larger input.
    x2 = jax.random.normal(jax.random.PRNGKey(1), (16, 8, 32, 32), dtype=jnp.float32)
    y2 = flatten_pallas(x2, force_pallas=True)
    jax.block_until_ready(y2)
    assert jnp.array_equal(y2, x2.reshape(16, -1))

    # Exercise the non-128-divisible fallback path (odd sizes, bf16).
    x3 = jax.random.normal(jax.random.PRNGKey(2), (3, 5, 7), dtype=jnp.bfloat16)
    y3 = flatten_pallas(x3, force_pallas=True)
    jax.block_until_ready(y3)
    assert jnp.array_equal(y3, x3.reshape(3, -1))

    print("KERNEL_OK")
</pallas_src>

<mosaic_0001>
module attributes {stable_mosaic.version = 11 : i64} {
  func.func @_copy_kernel(%arg0: i32, %arg1: i32, %arg2: memref<1x2048xf32, #tpu.memory_space<vmem>>, %arg3: memref<1x2048xf32, #tpu.memory_space<vmem>>) attributes {dimension_semantics = [#tpu.dimension_semantics<parallel>, #tpu.dimension_semantics<parallel>], iteration_bounds = array<i64: 1, 1>, scalar_prefetch = 0 : i64, scratch_operands = 0 : i64, tpu.core_type = #tpu.core_type<tc>, window_params = [{transform_indices = @transform_0, window_bounds = array<i64: 1, 2048>}, {transform_indices = @transform_1, window_bounds = array<i64: 1, 2048>}]} {
    %c0 = arith.constant 0 : index
    %c0_0 = arith.constant 0 : index
    %0 = vector.load %arg2[%c0, %c0_0] : memref<1x2048xf32, #tpu.memory_space<vmem>>, vector<1x2048xf32>
    %c0_1 = arith.constant 0 : index
    %c0_2 = arith.constant 0 : index
    %1 = vector.load %arg3[%c0_1, %c0_2] : memref<1x2048xf32, #tpu.memory_space<vmem>>, vector<1x2048xf32>
    tpu.vector_store %arg3[%c0_1, %c0_2], %0 {strides = array<i32>} : memref<1x2048xf32, #tpu.memory_space<vmem>>, vector<1x2048xf32>,
    return
  }
  func.func @transform_0(%arg0: i32, %arg1: i32) -> (i32, i32) {
    %c0_i32 = arith.constant 0 : i32
    return %arg0, %arg1 : i32, i32
  }
  func.func @transform_1(%arg0: i32, %arg1: i32) -> (i32, i32) {
    %c0_i32 = arith.constant 0 : i32
    return %arg0, %arg1 : i32, i32
  }
}

</mosaic_0001>

<llo_original>
// kernel: tpu_custom_call.1
$region0: #{tpu_custom_call.1}
  #allocation0 [shape = 'u32[]', space=smem, size = 0x4, offset = 0x4, fixed_abs, tag = 'smem constant byte address 0x4 - core index']
  #allocation1 [shape = 'u32[144,128]{1,0:T(1,128)}', space=vmem, size = 0x12000, scoped, tag = 'internal scratch']
  %s0 = inlined_call_operand.hbm [shape: f32[1,2048], index: 0, kind: input, shape index: {}, may-alias: {0,1}]
  %s1 = inlined_call_operand.hbm [shape: f32[1,2048], index: 1, kind: output, shape index: {}, may-alias: {0,1}]
  %s2 = sld [smem:[#allocation0]]
  $region18: #{tpu_custom_call.1} parent=0
    _
  %s4 = ssub.s32 1, %s2
  %s5 = scalar_select 0, %s4, %s2
  $region1: #{tpu_custom_call.1} parent=0
    #allocation2 [shape = 'u8[8192]{0}', space=vmem, size = 0x2000, scoped, tag = 'input window, operand 0, single buffered']
    #allocation3 [shape = 's32[1]{0}', space=sflag, size = 0x4, scoped, tag = 'scoped memory for tpu_custom_call.1']
    #allocation4 [shape = 's32[1]{0}', space=sflag, size = 0x4, scoped, tag = 'scoped memory for tpu_custom_call.1']
    #allocation5 [shape = 'u8[8192]{0}', space=vmem, size = 0x2000, scoped, tag = 'output window, operand 0, single buffered']
    %6 = vsyncpa [#allocation3], 0
    %7 = vsyncpa [#allocation4], 0
    // Predicated region
    $region2: #{tpu_custom_call.1} parent=1 // pred_check
      _
    $region3: #{tpu_custom_call.1} parent=1 // pred_check_branch
      %9 = sbr.rel (0) target = $region5
    $region4: #{tpu_custom_call.1} parent=1 // pred_region
      %s11 = ssub.s32 256, 256
      %12 = vsyncadd [#allocation3], %s11
      %s14 = sshll.u32 [#allocation2], 4
      %s15 = int_to_ptr.vmem [resolvable:$true] %s14
      %17 = dma.hbm_to_vmem [thread:$0]  %s0, 256, %s15, [#allocation3]
    $region5: #{tpu_custom_call.1} parent=1 // pred_fallthru
      _
    // Predicated region
    $region6: #{tpu_custom_call.1} parent=1 // pred_check
      _
    $region7: #{tpu_custom_call.1} parent=1 // pred_check_branch
      %19 = sbr.rel (0) target = $region9
    $region8: #{tpu_custom_call.1} parent=1 // pred_region
      %20 = dma.done [#allocation3], 256
    $region9: #{tpu_custom_call.1} parent=1 // pred_fallthru
      _
    %v21 = vld [vmem:[#allocation2] sm:$0xff]
    %v22 = vld [vmem:[#allocation2 + $0x8] sm:$0xff]
    %23 = vst [vmem:[#allocation5] sm:$0xff] %v21
    %24 = vst [vmem:[#allocation5 + $0x8] sm:$0xff] %v22
    // Predicated region
    $region10: #{tpu_custom_call.1} parent=1 // pred_check
      _
    $region11: #{tpu_custom_call.1} parent=1 // pred_check_branch
      %26 = sbr.rel (0) target = $region13
    $region12: #{tpu_custom_call.1} parent=1 // pred_region
      %s28 = ssub.s32 256, 256
      %29 = vsyncadd [#allocation4], %s28
      %s31 = sshll.u32 [#allocation5], 4
      %s32 = int_to_ptr.vmem [resolvable:$true] %s31
      %34 = dma.vmem_to_hbm [thread:$0]  %s32, 256, %s1, [#allocation4]
    $region13: #{tpu_custom_call.1} parent=1 // pred_fallthru
      _
    // Predicated region
    $region14: #{tpu_custom_call.1} parent=1 // pred_check
      _
    $region15: #{tpu_custom_call.1} parent=1 // pred_check_branch
      %36 = sbr.rel (0) target = $region17
    $region16: #{tpu_custom_call.1} parent=1 // pred_region
      %37 = dma.done [#allocation4], 256
    $region17: #{tpu_custom_call.1} parent=1 // pred_fallthru
      _
    %38 = vsyncpa [#allocation3], 1
    %39 = vsyncpa [#allocation4], 1

</llo_original>
